<compile_context>
chip_gen: v7x
topology: tpu7x:2x2x1
jax: 0.10.0
libtpu: 0.0.40
codegen_flags: <defaults>
</compile_context>

<pallas_src>
import functools

import jax
import jax.numpy as jnp
from jax.experimental import pallas as pl
from jax.experimental.pallas import tpu as pltpu


def _round_up(x: int, m: int) -> int:
    return ((x + m - 1) // m) * m


def _cotuning_kernel(x_ref, t_ref, o_ref, *, true_b: int, need_mask: bool):
    """One row tile: (TM, N_p) logits + soft targets -> scalar partial sum."""
    x = x_ref[...].astype(jnp.float32)      # (TM, N_p) source-classifier logits
    t = t_ref[...].astype(jnp.float32)      # (TM, N_p) relationship p(y_s | y_t)

    if need_mask:
        # Ragged final row block: out-of-bounds rows hold unspecified bits.
        # Mask BOTH operands before any arithmetic so garbage (NaN/inf) never
        # enters the max/exp/multiply; masked rows then contribute exactly 0.
        tm = x.shape[0]
        row = pl.program_id(0) * tm + jax.lax.broadcasted_iota(jnp.int32, x.shape, 0)
        valid = row < true_b
        x = jnp.where(valid, x, 0.0)
        t = jnp.where(valid, t, 0.0)

    # Fused, numerically-stable cross-entropy without keeping z = x - m live:
    #   -sum(t * (x - m - lse)) = (m + lse) * sum(t) - sum(t * x)
    m = jnp.max(x, axis=-1, keepdims=True)                          # (TM, 1)
    s_t = jnp.sum(t, axis=-1, keepdims=True)                        # (TM, 1)
    s_tx = jnp.sum(t * x, axis=-1, keepdims=True)                   # (TM, 1)
    lse = jnp.log(jnp.sum(jnp.exp(x - m), axis=-1, keepdims=True))  # (TM, 1)
    per_row = (m + lse) * s_t - s_tx                                # (TM, 1)

    # One f32 partial sum per tile (masked rows: s_t = s_tx = 0 -> 0).
    o_ref[...] = jnp.sum(per_row).reshape(1, 1, 1)


def _vmem_limit_bytes() -> int:
    """Generation-aware scoped-VMEM limit (3/4 of physical, capped at 96 MiB)."""
    try:
        cap = int(pltpu.get_tpu_info().vmem_capacity_bytes)
    except Exception:
        cap = 64 * 1024 * 1024  # conservative (v7x per-TC) fallback
    return min((cap * 3) // 4, 96 * 1024 * 1024)


def _choose_row_tile(b: int, n_p: int, itemsize: int, budget_bytes: int) -> int:
    """Row tile sized from VMEM budget (no hard cap), >=2 tiles when b >= 16."""
    n_lanes = _round_up(n_p, 128)  # VMEM tiles are lane-padded
    # Per resident row: 2 inputs x 2 pipeline buffers + ~6 f32-wide temporaries
    # (f32 upcasts of x and t, exp / t*x intermediates, headroom for codegen).
    per_row = n_lanes * (4 * itemsize + 24)
    tm_max = max(8, ((budget_bytes // per_row) // 8) * 8)
    if b < 16:
        # Tiny batch: a single full-extent row block needs no padding/masking.
        return b if b <= tm_max else tm_max
    # Guarantee >= 2 tiles so both TensorCores stream on v7x (cheap on 1-TC chips).
    two_tile = _round_up(-(-b // 2), 8)
    return max(8, min(tm_max, two_tile))


def co_tuning_loss(inp: jax.Array, target: jax.Array, row_tile: int | None = None) -> jax.Array:
    """Scalar Co-Tuning loss. inp, target: (b, N_p) float (f32 or bf16)."""
    assert inp.shape == target.shape and inp.ndim == 2
    b, n_p = inp.shape
    itemsize = jnp.dtype(inp.dtype).itemsize
    vmem_limit = _vmem_limit_bytes()

    if row_tile is None:
        tm = _choose_row_tile(b, n_p, itemsize, vmem_limit)
    else:
        tm = b if row_tile >= b else max(8, (row_tile // 8) * 8)

    num_tiles = -(-b // tm)           # cdiv: ragged final block handled in-kernel
    need_mask = (b % tm) != 0

    kernel = functools.partial(_cotuning_kernel, true_b=b, need_mask=need_mask)

    partials = pl.pallas_call(
        kernel,
        out_shape=jax.ShapeDtypeStruct((num_tiles, 1, 1), jnp.float32),
        grid=(num_tiles,),
        in_specs=[
            # Class dim is full-extent (exempt from 128 divisibility); row dim is
            # a multiple of 8 or full-extent -> no wrapper-side padding copies.
            pl.BlockSpec((tm, n_p), lambda i: (i, 0)),
            pl.BlockSpec((tm, n_p), lambda i: (i, 0)),
        ],
        out_specs=pl.BlockSpec((1, 1, 1), lambda i: (i, 0, 0)),
        compiler_params=pltpu.CompilerParams(
            dimension_semantics=("parallel",),
            vmem_limit_bytes=vmem_limit,
        ),
        cost_estimate=pl.CostEstimate(
            flops=6 * b * n_p,
            transcendentals=b * n_p,
            bytes_accessed=2 * b * n_p * itemsize + num_tiles * 4,
        ),
    )(inp, target)

    # Final reduction + mean over the true batch size in the wrapper.
    return jnp.sum(partials) / jnp.float32(b)


def co_tuning_loss_ref(inp: jax.Array, target: jax.Array) -> jax.Array:
    log_sm = jax.nn.log_softmax(inp.astype(jnp.float32), axis=-1)
    y = -target.astype(jnp.float32) * log_sm
    return jnp.mean(jnp.sum(y, axis=-1))


if __name__ == "__main__":
    key = jax.random.PRNGKey(0)

    # (shape, forced row tile, dtype)
    #  - (7, 33): ragged class dim + single full-extent row tile
    #  - (24, 32) @ tile 8: multi-tile "parallel" grid, divisible rows
    #  - (19, 40) @ tile 8: ragged final row block -> in-kernel mask path
    #  - (16, 128) bf16: halved HBM traffic, auto 2-tile grid
    cases = [
        ((8, 32), None, jnp.float32),
        ((7, 33), None, jnp.float32),
        ((24, 32), 8, jnp.float32),
        ((19, 40), 8, jnp.float32),
        ((16, 128), None, jnp.bfloat16),
    ]

    for (b, n_p), row_tile, dtype in cases:
        key, k1, k2 = jax.random.split(key, 3)
        # Logits p(y_s) from the source classifier.
        inp = jax.random.normal(k1, (b, n_p), dtype=jnp.float32).astype(dtype)
        # Soft target distribution p(y_s | y_t): nonnegative, rows sum to 1.
        target = jax.nn.softmax(
            jax.random.normal(k2, (b, n_p), dtype=jnp.float32), axis=-1
        ).astype(dtype)

        loss = jax.block_until_ready(co_tuning_loss(inp, target, row_tile=row_tile))
        ref = jax.block_until_ready(co_tuning_loss_ref(inp, target))
        assert jnp.allclose(loss, ref, rtol=1e-4, atol=1e-4), ((b, n_p), loss, ref)

    print("KERNEL_OK")
</pallas_src>

<mosaic_0001>
module attributes {stable_mosaic.version = 11 : i64} {
  func.func @_cotuning_kernel(%arg0: i32, %arg1: memref<8x32xf32, #tpu.memory_space<vmem>>, %arg2: memref<8x32xf32, #tpu.memory_space<vmem>>, %arg3: memref<1x1x1xf32, #tpu.memory_space<vmem>>) attributes {dimension_semantics = [#tpu.dimension_semantics<parallel>], iteration_bounds = array<i64: 1>, scalar_prefetch = 0 : i64, scratch_operands = 0 : i64, tpu.core_type = #tpu.core_type<tc>, window_params = [{transform_indices = @transform_0, window_bounds = array<i64: 8, 32>}, {transform_indices = @transform_1, window_bounds = array<i64: 8, 32>}, {transform_indices = @transform_2, window_bounds = array<i64: 1, 1, 1>}]} {
    %c0 = arith.constant 0 : index
    %c0_0 = arith.constant 0 : index
    %0 = vector.load %arg1[%c0, %c0_0] : memref<8x32xf32, #tpu.memory_space<vmem>>, vector<8x32xf32>
    %c0_1 = arith.constant 0 : index
    %c0_2 = arith.constant 0 : index
    %1 = vector.load %arg2[%c0_1, %c0_2] : memref<8x32xf32, #tpu.memory_space<vmem>>, vector<8x32xf32>
    %cst = arith.constant dense<0xFF800000> : vector<8xf32>
    %2 = vector.multi_reduction <maximumf>, %0, %cst [1] : vector<8x32xf32> to vector<8xf32>
    %3 = vector.shape_cast %2 : vector<8xf32> to vector<8x1xf32>
    %cst_3 = arith.constant dense<0.000000e+00> : vector<8xf32>
    %4 = vector.multi_reduction <add>, %1, %cst_3 [1] : vector<8x32xf32> to vector<8xf32>
    %5 = vector.shape_cast %4 : vector<8xf32> to vector<8x1xf32>
    %6 = arith.mulf %1, %0 : vector<8x32xf32>
    %cst_4 = arith.constant dense<0.000000e+00> : vector<8xf32>
    %7 = vector.multi_reduction <add>, %6, %cst_4 [1] : vector<8x32xf32> to vector<8xf32>
    %8 = vector.shape_cast %7 : vector<8xf32> to vector<8x1xf32>
    %9 = vector.broadcast %3 : vector<8x1xf32> to vector<8x32xf32>
    %10 = arith.subf %0, %9 : vector<8x32xf32>
    %11 = math.exp %10 : vector<8x32xf32>
    %cst_5 = arith.constant dense<0.000000e+00> : vector<8xf32>
    %12 = vector.multi_reduction <add>, %11, %cst_5 [1] : vector<8x32xf32> to vector<8xf32>
    %13 = vector.shape_cast %12 : vector<8xf32> to vector<8x1xf32>
    %14 = math.log %13 : vector<8x1xf32>
    %15 = arith.addf %3, %14 : vector<8x1xf32>
    %16 = arith.mulf %15, %5 : vector<8x1xf32>
    %17 = arith.subf %16, %8 : vector<8x1xf32>
    %18 = vector.shape_cast %17 : vector<8x1xf32> to vector<1x8x1xf32>
    %cst_6 = arith.constant dense<0.000000e+00> : vector<1xf32>
    %19 = vector.multi_reduction <add>, %18, %cst_6 [1, 2] : vector<1x8x1xf32> to vector<1xf32>
    %20 = vector.shape_cast %19 : vector<1xf32> to vector<1x1x1xf32>
    %21 = vector.extract %20[0, 0, 0] : f32 from vector<1x1x1xf32>
    %22 = vector.broadcast %21 : f32 to vector<1x1x1xf32>
    %c0_7 = arith.constant 0 : index
    %c0_8 = arith.constant 0 : index
    %c0_9 = arith.constant 0 : index
    %23 = vector.load %arg3[%c0_7, %c0_8, %c0_9] : memref<1x1x1xf32, #tpu.memory_space<vmem>>, vector<1x1x1xf32>
    tpu.vector_store %arg3[%c0_7, %c0_8, %c0_9], %22 {strides = array<i32>} : memref<1x1x1xf32, #tpu.memory_space<vmem>>, vector<1x1x1xf32>,
    return
  }
  func.func @transform_0(%arg0: i32) -> (i32, i32) {
    %c0_i32 = arith.constant 0 : i32
    %c0_i32_0 = arith.constant 0 : i32
    return %arg0, %c0_i32 : i32, i32
  }
  func.func @transform_1(%arg0: i32) -> (i32, i32) {
    %c0_i32 = arith.constant 0 : i32
    %c0_i32_0 = arith.constant 0 : i32
    return %arg0, %c0_i32 : i32, i32
  }
  func.func @transform_2(%arg0: i32) -> (i32, i32, i32) {
    %c0_i32 = arith.constant 0 : i32
    %c0_i32_0 = arith.constant 0 : i32
    %c0_i32_1 = arith.constant 0 : i32
    return %arg0, %c0_i32, %c0_i32_0 : i32, i32, i32
  }
}

</mosaic_0001>

<llo_original>
// kernel: tpu_custom_call.1
$region0: #{tpu_custom_call.1}
  #allocation0 [shape = 'u32[]', space=smem, size = 0x4, offset = 0x4, fixed_abs, tag = 'smem constant byte address 0x4 - core index']
  #allocation1 [shape = 'u32[144,128]{1,0:T(1,128)}', space=vmem, size = 0x12000, scoped, tag = 'internal scratch']
  %s0 = inlined_call_operand.hbm [shape: f32[8,32], index: 0, kind: input, shape index: {}]
  %s1 = inlined_call_operand.hbm [shape: f32[8,32], index: 1, kind: input, shape index: {}]
  %s2 = inlined_call_operand.hbm [shape: f32[1,1,1], index: 2, kind: output, shape index: {}]
  %s3 = sld [smem:[#allocation0]]
  $region26: #{tpu_custom_call.1} parent=0
    _
  %s5 = ssub.s32 1, %s3
  %s6 = scalar_select 0, %s5, %s3
  $region1: #{tpu_custom_call.1} parent=0
    #allocation2 [shape = 'u8[4096]{0}', space=vmem, size = 0x1000, scoped, tag = 'input window, operand 0, single buffered']
    #allocation3 [shape = 's32[1]{0}', space=sflag, size = 0x4, scoped, tag = 'scoped memory for tpu_custom_call.1']
    #allocation4 [shape = 's32[1]{0}', space=sflag, size = 0x4, scoped, tag = 'scoped memory for tpu_custom_call.1']
    #allocation5 [shape = 'u8[4096]{0}', space=vmem, size = 0x1000, scoped, tag = 'input window, operand 1, single buffered']
    #allocation6 [shape = 's32[1]{0}', space=sflag, size = 0x4, scoped, tag = 'scoped memory for tpu_custom_call.1']
    #allocation7 [shape = 'u8[512]{0}', space=vmem, size = 0x400, scoped, tag = 'output window, operand 0, single buffered']
    %7 = vsyncpa [#allocation3], 0
    %8 = vsyncpa [#allocation6], 0
    %9 = vsyncpa [#allocation4], 0
    // Predicated region
    $region2: #{tpu_custom_call.1} parent=1 // pred_check
      _
    $region3: #{tpu_custom_call.1} parent=1 // pred_check_branch
      %11 = sbr.rel (0) target = $region5
    $region4: #{tpu_custom_call.1} parent=1 // pred_region
      %s13 = ssub.s32 128, 128
      %14 = vsyncadd [#allocation3], %s13
      %s16 = sshll.u32 [#allocation2], 4
      %s17 = int_to_ptr.vmem [resolvable:$true] %s16
      %19 = dma.hbm_to_vmem [thread:$0]  %s0, 128, %s17, [#allocation3]
    $region5: #{tpu_custom_call.1} parent=1 // pred_fallthru
      _
    // Predicated region
    $region6: #{tpu_custom_call.1} parent=1 // pred_check
      _
    $region7: #{tpu_custom_call.1} parent=1 // pred_check_branch
      %21 = sbr.rel (0) target = $region9
    $region8: #{tpu_custom_call.1} parent=1 // pred_region
      %s23 = ssub.s32 128, 128
      %24 = vsyncadd [#allocation6], %s23
      %s26 = sshll.u32 [#allocation5], 4
      %s27 = int_to_ptr.vmem [resolvable:$true] %s26
      %29 = dma.hbm_to_vmem [thread:$0]  %s1, 128, %s27, [#allocation6]
    $region9: #{tpu_custom_call.1} parent=1 // pred_fallthru
      _
    // Predicated region
    $region10: #{tpu_custom_call.1} parent=1 // pred_check
      _
    $region11: #{tpu_custom_call.1} parent=1 // pred_check_branch
      %31 = sbr.rel (0) target = $region13
    $region12: #{tpu_custom_call.1} parent=1 // pred_region
      %32 = dma.done [#allocation3], 128
    $region13: #{tpu_custom_call.1} parent=1 // pred_fallthru
      _
    // Predicated region
    $region14: #{tpu_custom_call.1} parent=1 // pred_check
      _
    $region15: #{tpu_custom_call.1} parent=1 // pred_check_branch
      %34 = sbr.rel (0) target = $region17
    $region16: #{tpu_custom_call.1} parent=1 // pred_region
      %35 = dma.done [#allocation6], 128
    $region17: #{tpu_custom_call.1} parent=1 // pred_fallthru
      _
    %v36 = vld [vmem:[#allocation2] sm:$0xff]
    %v37 = vld [vmem:[#allocation5] sm:$0xff]
    %vm38 = vcmask 261120
    %v39 = vsel %vm38, %v36, -inf
    %40 = vmax.xlane.f32.xlu0 %v39
    %v41 = vpop.xlane.xlu0 %40
    %v42 = vsel %vm38, %v37, 0.0
    %43 = vadd.xlane.f32.xlu0 %v42
    %v44 = vpop.xlane.xlu0 %43
    %v45 = vmul.f32 %v37, %v36
    %v46 = vsel %vm38, %v45, 0.0
    %47 = vadd.xlane.f32.xlu0 %v46
    %v48 = vpop.xlane.xlu0 %47
    %v49 = vsub.f32 %v36, %v41
    %v50 = vmul.f32 %v49, 1.442695
    %v51 = vpow.pop %v50
    %v52 = vsel %vm38, %v51, 0.0
    %53 = vadd.xlane.f32.xlu0 %v52
    %v54 = vpop.xlane.xlu0 %53
    %v55 = vlog2.pop %v54
    %v56 = vmul.f32 %v55, 0.6931472
    %v57 = vadd.f32 %v41, %v56
    %v58 = vmul.f32 %v57, %v44
    %v59 = vsub.f32 %v58, %v48
    %vm60 = vcmask 7168
    %v61 = vsel %vm60, %v59, 0.0
    %62 = vadd.xlane.f32.xlu0 %v61
    %v63 = vpop.xlane.xlu0 %62
    %v64 = vrot.slane %v63, 4
    %v65 = vadd.f32 %v63, %v64
    %v66 = vrot.slane %v65, 2
    %v67 = vadd.f32 %v65, %v66
    %v68 = vrot.slane %v67, 1
    %v69 = vadd.f32 %v67, %v68
    %s70 = vtos %v69
    %v71 = vstv %s70
    %vm72 = vcmask 0
    %73 = vst.msk [vmem:[#allocation7] sm:$0x1] %vm72, %v71
    // Predicated region
    $region18: #{tpu_custom_call.1} parent=1 // pred_check
      _
    $region19: #{tpu_custom_call.1} parent=1 // pred_check_branch
      %75 = sbr.rel (0) target = $region21
    $region20: #{tpu_custom_call.1} parent=1 // pred_region
      %s77 = ssub.s32 16, 16
      %78 = vsyncadd [#allocation4], %s77
      %s80 = sshll.u32 [#allocation7], 4
      %s81 = int_to_ptr.vmem [resolvable:$true] %s80
      %83 = dma.vmem_to_hbm [thread:$0]  %s81, 16, %s2, [#allocation4]
    $region21: #{tpu_custom_call.1} parent=1 // pred_fallthru
      _
    // Predicated region
    $region22: #{tpu_custom_call.1} parent=1 // pred_check
      _
    $region23: #{tpu_custom_call.1} parent=1 // pred_check_branch
      %85 = sbr.rel (0) target = $region25
    $region24: #{tpu_custom_call.1} parent=1 // pred_region
      %86 = dma.done [#allocation4], 16
    $region25: #{tpu_custom_call.1} parent=1 // pred_fallthru
      _
    %87 = vsyncpa [#allocation3], 1
    %88 = vsyncpa [#allocation6], 1
    %89 = vsyncpa [#allocation4], 1

</llo_original>
